<compile_context>
chip_gen: v5e
topology: v5e:2x2
jax: 0.10.0
libtpu: 0.0.40
codegen_flags: <defaults>
</compile_context>

<pallas_src>
import math

import jax
import jax.numpy as jnp
import numpy as np
from jax.experimental import pallas as pl
from jax.experimental.pallas import tpu as pltpu  # noqa: F401  (kept for TPU-specific tuning)

# ---------------- configuration (small synthetic sizes) ----------------
B = 2           # batch
N_X = 8         # set size of X
N_Y = 8         # set size of Y
INPUT = 4       # input_size
LATENT = 32     # latent_size
HIDDEN = 32     # hidden_size (slab packing assumes HIDDEN == LATENT)
OUTPUT = 1      # output_size
NUM_HEADS = 4
HEAD_DIM = LATENT // NUM_HEADS
SCALE = 1.0 / math.sqrt(LATENT)   # torch code scales by sqrt(latent_size), not head_dim

# ---------------- slab row offsets (weights) ----------------
WP_ROWS = ((INPUT + 7) // 8) * 8              # wp padded to a sublane multiple of 8
POOL_W_OFF = WP_ROWS                          # pool p weights start here
POOL_W_STRIDE = 6 * LATENT                    # wq,wk,wv,wo,w1,w2 -> 6 * L rows per pool
WD1_OFF = POOL_W_OFF + 2 * POOL_W_STRIDE
WD2_OFF = WD1_OFF + 2 * LATENT
HSEL_OFF = WD2_OFF + LATENT
HSELT_OFF = HSEL_OFF + LATENT
HSELT_ROWS = ((NUM_HEADS + 7) // 8) * 8
W_SLAB_ROWS = HSELT_OFF + HSELT_ROWS

# ---------------- slab row offsets (vectors: seeds / biases) ----------------
V_BP = 0
POOL_V_OFF = 1                                # S,bq,bk,bv,bo,b1,b2 -> 7 rows per pool
POOL_V_STRIDE = 7
V_BD1 = POOL_V_OFF + 2 * POOL_V_STRIDE
V_BD2 = V_BD1 + 1
V_SLAB_ROWS = V_BD2 + 1


# ======================= fused Pallas kernel ============================
def fused_kernel(x_ref, y_ref, w_ref, v_ref, out_ref):
    """proj -> PMA(pool1 on X) / PMA(pool2 on Y) -> decoder, whole batch at once.

    x_ref : (B*N_X, INPUT)     y_ref : (B*N_Y, INPUT)
    w_ref : (W_SLAB_ROWS, LATENT)   row-stacked weight matrices
    v_ref : (V_SLAB_ROWS, LATENT)   one seed/bias vector per row
    out_ref: (B, OUTPUT)
    """
    L, H = LATENT, NUM_HEADS
    f32 = jnp.float32

    wp = w_ref[0:INPUT, :]                          # (INPUT, L)
    bp = v_ref[V_BP:V_BP + 1, :]                    # (1, L)
    hsel = w_ref[HSEL_OFF:HSEL_OFF + L, 0:H]        # (L, H)  0/1 head-selector
    hselT = w_ref[HSELT_OFF:HSELT_OFF + H, :]       # (H, L)  its transpose

    sets = (x_ref[...], y_ref[...])
    n_sets = (N_X, N_Y)
    pooled = []
    for p in range(2):                              # static unroll: pool1 / pool2
        wb = POOL_W_OFF + p * POOL_W_STRIDE
        vb = POOL_V_OFF + p * POOL_V_STRIDE
        wq = w_ref[wb + 0 * L: wb + 1 * L, :]
        wk = w_ref[wb + 1 * L: wb + 2 * L, :]
        wv = w_ref[wb + 2 * L: wb + 3 * L, :]
        wo = w_ref[wb + 3 * L: wb + 4 * L, :]
        w1 = w_ref[wb + 4 * L: wb + 5 * L, :]
        w2 = w_ref[wb + 5 * L: wb + 6 * L, :]
        s = v_ref[vb + 0: vb + 1, :]                # (1, L) learned seed (PMA.S)
        bq = v_ref[vb + 1: vb + 2, :]
        bk = v_ref[vb + 2: vb + 3, :]
        bv = v_ref[vb + 3: vb + 4, :]
        bo = v_ref[vb + 4: vb + 5, :]
        b1 = v_ref[vb + 5: vb + 6, :]
        b2 = v_ref[vb + 6: vb + 7, :]

        n_set = n_sets[p]
        rows = B * n_set

        # shared input projection
        z = jnp.dot(sets[p], wp, preferred_element_type=f32) + bp          # (rows, L)

        # Q from the seed (batch-independent), K/V from the set
        q = jnp.dot(s, wq, preferred_element_type=f32) + bq                # (1, L)
        k = jnp.dot(z, wk, preferred_element_type=f32) + bk                # (rows, L)
        v = jnp.dot(z, wv, preferred_element_type=f32) + bv                # (rows, L)

        # per-head logits: e[bn, h] = sum_{l in head h} q[l] * k[bn, l]
        e = jnp.dot(k * q, hsel, preferred_element_type=f32) * SCALE       # (rows, H)
        e = e.reshape(B, n_set, H)
        e = e - jnp.max(e, axis=1, keepdims=True)
        pe = jnp.exp(e)
        a = pe / jnp.sum(pe, axis=1, keepdims=True)                        # (B, N, H)

        # broadcast head weights back to L lanes and reduce over the set
        a_full = jnp.dot(a.reshape(rows, H), hselT,
                         preferred_element_type=f32)                       # (rows, L)
        o = jnp.sum((a_full * v).reshape(B, n_set, L), axis=1)             # (B, L)
        o = jnp.dot(o, wo, preferred_element_type=f32) + bo                # w_o

        # MAB residual + feed-forward (alpha0=alpha1=1, dropout identity, no LN)
        x1 = s + o                                                         # (B, L)
        hff = jnp.maximum(jnp.dot(x1, w1, preferred_element_type=f32) + b1, 0.0)
        x2 = x1 + jnp.dot(hff, w2, preferred_element_type=f32) + b2
        pooled.append(x2)                                                  # (B, L)

    zx, zy = pooled
    # decoder(cat([ZX, ZY], -1)) without the concat: split wd1 rows instead.
    wd1a = w_ref[WD1_OFF:WD1_OFF + L, :]
    wd1b = w_ref[WD1_OFF + L:WD1_OFF + 2 * L, :]
    wd2 = w_ref[WD2_OFF:WD2_OFF + L, :]            # (L, L), only col 0 non-zero
    bd1 = v_ref[V_BD1:V_BD1 + 1, :]
    bd2 = v_ref[V_BD2:V_BD2 + 1, 0:OUTPUT]
    hdec = jnp.maximum(
        jnp.dot(zx, wd1a, preferred_element_type=f32)
        + jnp.dot(zy, wd1b, preferred_element_type=f32) + bd1, 0.0)
    out_pad = jnp.dot(hdec, wd2, preferred_element_type=f32)               # (B, L)
    out_ref[...] = out_pad[:, 0:OUTPUT] + bd2                              # (B, OUTPUT)


# ======================= parameter packing (done ONCE at init) =========
def pack_params(params):
    """Pack all parameters into two lane-/sublane-aligned slabs (2 DMAs total)."""
    assert HIDDEN == LATENT, "slab packing assumes hidden_size == latent_size"
    wp, bp = params["proj"]
    pools = [params["pool1"], params["pool2"]]
    wd1, bd1, wd2, bd2 = params["dec"]
    L, H = LATENT, NUM_HEADS

    def pad_rows(m, rows):
        return jnp.pad(m, ((0, rows - m.shape[0]), (0, 0)))

    def pad_cols(m, cols):
        return jnp.pad(m, ((0, 0), (0, cols - m.shape[1])))

    # 0/1 head-selector masks (exact), precomputed so the kernel has no iota work
    hsel = (jnp.arange(L)[:, None] // HEAD_DIM ==
            jnp.arange(H)[None, :]).astype(jnp.float32)                    # (L, H)
    hselT = hsel.T                                                         # (H, L)

    w_rows = [pad_rows(wp, WP_ROWS)]
    for (S, wq, bq, wk, bk, wv, bv, wo, bo, w1, b1, w2, b2) in pools:
        w_rows += [wq, wk, wv, wo, w1, w2]
    w_rows += [wd1, pad_cols(wd2, L), pad_cols(hsel, L), pad_rows(hselT, HSELT_ROWS)]
    w_slab = jnp.concatenate(w_rows, axis=0)
    assert w_slab.shape == (W_SLAB_ROWS, LATENT), w_slab.shape

    v_rows = [bp]
    for (S, wq, bq, wk, bk, wv, bv, wo, bo, w1, b1, w2, b2) in pools:
        v_rows += [S, bq, bk, bv, bo, b1, b2]
    v_rows += [bd1, pad_cols(bd2, L)]
    v_slab = jnp.concatenate(v_rows, axis=0)
    assert v_slab.shape == (V_SLAB_ROWS, LATENT), v_slab.shape
    return w_slab, v_slab


# ======================= jitted forward =================================
@jax.jit
def forward(X, Y, w_slab, v_slab):
    """NaiveMultiSetModel.forward (equi=False, num_blocks=0 encoders = identity)."""
    x2d = X.reshape(B * N_X, INPUT)
    y2d = Y.reshape(B * N_Y, INPUT)
    out2d = pl.pallas_call(
        fused_kernel,
        out_shape=jax.ShapeDtypeStruct((B, OUTPUT), jnp.float32),
    )(x2d, y2d, w_slab, v_slab)
    # torch: decoder(...) is (B, 1, OUTPUT); .squeeze(-1) -> (B, 1) when OUTPUT == 1.
    return out2d if OUTPUT == 1 else out2d[:, None, :]


# ======================= parameter init =================================
def _linear(key, fan_in, fan_out):
    kw, kb = jax.random.split(key)
    bound = 1.0 / math.sqrt(fan_in)
    w = jax.random.uniform(kw, (fan_in, fan_out), jnp.float32, -bound, bound)
    b = jax.random.uniform(kb, (1, fan_out), jnp.float32, -bound, bound)
    return w, b


def _make_pool(key):
    ks = jax.random.split(key, 7)
    gain = math.sqrt(6.0 / (2 * LATENT))                 # xavier_uniform_ for (1,1,L) seed
    S = jax.random.uniform(ks[0], (1, LATENT), jnp.float32, -gain, gain)
    wq, bq = _linear(ks[1], LATENT, LATENT)
    wk, bk = _linear(ks[2], LATENT, LATENT)
    wv, bv = _linear(ks[3], LATENT, LATENT)
    wo, bo = _linear(ks[4], LATENT, LATENT)
    w1, b1 = _linear(ks[5], LATENT, HIDDEN)
    w2, b2 = _linear(ks[6], HIDDEN, LATENT)
    return (S, wq, bq, wk, bk, wv, bv, wo, bo, w1, b1, w2, b2)


def init_params(key):
    kp, k1, k2, kd1, kd2 = jax.random.split(key, 5)
    proj = _linear(kp, INPUT, LATENT)
    pool1 = _make_pool(k1)
    pool2 = _make_pool(k2)
    wd1, bd1 = _linear(kd1, 2 * LATENT, HIDDEN)
    wd2, bd2 = _linear(kd2, HIDDEN, OUTPUT)
    return {"proj": proj, "pool1": pool1, "pool2": pool2, "dec": (wd1, bd1, wd2, bd2)}


# ======================= pure-JAX reference ==============================
def _ref_pma(x, proj, pool):
    wp, bp = proj
    S, wq, bq, wk, bk, wv, bv, wo, bo, w1, b1, w2, b2 = pool
    z = x @ wp + bp                                       # proj
    Bx = x.shape[0]
    s = jnp.broadcast_to(S[None], (Bx, 1, LATENT))        # S.repeat(B,1,1)
    q = s @ wq + bq
    k = z @ wk + bk
    v = z @ wv + bv
    qh = q.reshape(Bx, -1, NUM_HEADS, HEAD_DIM).transpose(2, 0, 1, 3)
    kh = k.reshape(Bx, -1, NUM_HEADS, HEAD_DIM).transpose(2, 0, 1, 3)
    vh = v.reshape(Bx, -1, NUM_HEADS, HEAD_DIM).transpose(2, 0, 1, 3)
    e = jnp.einsum("hbqd,hbkd->hbqk", qh, kh) * SCALE
    a = jax.nn.softmax(e, axis=-1)
    o = jnp.einsum("hbqk,hbkd->hbqd", a, vh)
    o = o.transpose(1, 2, 0, 3).reshape(Bx, 1, LATENT)
    o = o @ wo + bo
    x1 = s + o
    h = jax.nn.relu(x1 @ w1 + b1)
    return x1 + h @ w2 + b2


def forward_ref(X, Y, params):
    zx = _ref_pma(X, params["proj"], params["pool1"])
    zy = _ref_pma(Y, params["proj"], params["pool2"])
    wd1, bd1, wd2, bd2 = params["dec"]
    z = jnp.concatenate([zx, zy], axis=-1)
    out = jax.nn.relu(z @ wd1 + bd1) @ wd2 + bd2          # (B,1,OUTPUT)
    return out[..., 0] if OUTPUT == 1 else out


# ======================= main ============================================
if __name__ == "__main__":
    key = jax.random.PRNGKey(0)
    kparam, kx, ky = jax.random.split(key, 3)
    params = init_params(kparam)
    # packing hoisted out of the per-call path: done once here.
    w_slab, v_slab = pack_params(params)

    X = jax.random.normal(kx, (B, N_X, INPUT), jnp.float32)
    Y = jax.random.normal(ky, (B, N_Y, INPUT), jnp.float32)

    out = forward(X, Y, w_slab, v_slab)
    out = jax.block_until_ready(out)

    ref = forward_ref(X, Y, params)
    assert out.shape == ref.shape, (out.shape, ref.shape)
    np.testing.assert_allclose(np.asarray(out), np.asarray(ref), atol=1e-4, rtol=1e-4)

    print("KERNEL_OK")
</pallas_src>

<mosaic_0001>
module attributes {stable_mosaic.version = 11 : i64} {
  func.func @fused_kernel(%arg0: memref<16x4xf32, #tpu.memory_space<vmem>>, %arg1: memref<16x4xf32, #tpu.memory_space<vmem>>, %arg2: memref<528x32xf32, #tpu.memory_space<vmem>>, %arg3: memref<17x32xf32, #tpu.memory_space<vmem>>, %arg4: memref<2x1xf32, #tpu.memory_space<vmem>>) attributes {dimension_semantics = [], scalar_prefetch = 0 : i64, scratch_operands = 0 : i64, tpu.core_type = #tpu.core_type<tc>} {
    %c0 = arith.constant 0 : index
    %c0_0 = arith.constant 0 : index
    %0 = vector.load %arg2[%c0, %c0_0] : memref<528x32xf32, #tpu.memory_space<vmem>>, vector<4x32xf32>
    %c0_1 = arith.constant 0 : index
    %c0_2 = arith.constant 0 : index
    %1 = vector.load %arg3[%c0_1, %c0_2] : memref<17x32xf32, #tpu.memory_space<vmem>>, vector<1x32xf32>
    %c488 = arith.constant 488 : index
    %c0_3 = arith.constant 0 : index
    %2 = vector.load %arg2[%c488, %c0_3] : memref<528x32xf32, #tpu.memory_space<vmem>>, vector<32x4xf32>
    %c520 = arith.constant 520 : index
    %c0_4 = arith.constant 0 : index
    %3 = vector.load %arg2[%c520, %c0_4] : memref<528x32xf32, #tpu.memory_space<vmem>>, vector<4x32xf32>
    %c0_5 = arith.constant 0 : index
    %c0_6 = arith.constant 0 : index
    %4 = vector.load %arg0[%c0_5, %c0_6] : memref<16x4xf32, #tpu.memory_space<vmem>>, vector<16x4xf32>
    %c0_7 = arith.constant 0 : index
    %c0_8 = arith.constant 0 : index
    %5 = vector.load %arg1[%c0_7, %c0_8] : memref<16x4xf32, #tpu.memory_space<vmem>>, vector<16x4xf32>
    %c8 = arith.constant 8 : index
    %c0_9 = arith.constant 0 : index
    %6 = vector.load %arg2[%c8, %c0_9] : memref<528x32xf32, #tpu.memory_space<vmem>>, vector<32x32xf32>
    %c40 = arith.constant 40 : index
    %c0_10 = arith.constant 0 : index
    %7 = vector.load %arg2[%c40, %c0_10] : memref<528x32xf32, #tpu.memory_space<vmem>>, vector<32x32xf32>
    %c72 = arith.constant 72 : index
    %c0_11 = arith.constant 0 : index
    %8 = vector.load %arg2[%c72, %c0_11] : memref<528x32xf32, #tpu.memory_space<vmem>>, vector<32x32xf32>
    %c104 = arith.constant 104 : index
    %c0_12 = arith.constant 0 : index
    %9 = vector.load %arg2[%c104, %c0_12] : memref<528x32xf32, #tpu.memory_space<vmem>>, vector<32x32xf32>
    %c136 = arith.constant 136 : index
    %c0_13 = arith.constant 0 : index
    %10 = vector.load %arg2[%c136, %c0_13] : memref<528x32xf32, #tpu.memory_space<vmem>>, vector<32x32xf32>
    %c168 = arith.constant 168 : index
    %c0_14 = arith.constant 0 : index
    %11 = vector.load %arg2[%c168, %c0_14] : memref<528x32xf32, #tpu.memory_space<vmem>>, vector<32x32xf32>
    %c1 = arith.constant 1 : index
    %c0_15 = arith.constant 0 : index
    %12 = vector.load %arg3[%c1, %c0_15] : memref<17x32xf32, #tpu.memory_space<vmem>>, vector<1x32xf32>
    %c2 = arith.constant 2 : index
    %c0_16 = arith.constant 0 : index
    %13 = vector.load %arg3[%c2, %c0_16] : memref<17x32xf32, #tpu.memory_space<vmem>>, vector<1x32xf32>
    %c3 = arith.constant 3 : index
    %c0_17 = arith.constant 0 : index
    %14 = vector.load %arg3[%c3, %c0_17] : memref<17x32xf32, #tpu.memory_space<vmem>>, vector<1x32xf32>
    %c4 = arith.constant 4 : index
    %c0_18 = arith.constant 0 : index
    %15 = vector.load %arg3[%c4, %c0_18] : memref<17x32xf32, #tpu.memory_space<vmem>>, vector<1x32xf32>
    %c5 = arith.constant 5 : index
    %c0_19 = arith.constant 0 : index
    %16 = vector.load %arg3[%c5, %c0_19] : memref<17x32xf32, #tpu.memory_space<vmem>>, vector<1x32xf32>
    %c6 = arith.constant 6 : index
    %c0_20 = arith.constant 0 : index
    %17 = vector.load %arg3[%c6, %c0_20] : memref<17x32xf32, #tpu.memory_space<vmem>>, vector<1x32xf32>
    %c7 = arith.constant 7 : index
    %c0_21 = arith.constant 0 : index
    %18 = vector.load %arg3[%c7, %c0_21] : memref<17x32xf32, #tpu.memory_space<vmem>>, vector<1x32xf32>
    %cst = arith.constant dense<0.000000e+00> : vector<16x32xf32>
    %19 = tpu.matmul %4, %0, %cst {dimension_numbers = #tpu.dot_dimension_numbers<[1], [0], [0], [1], [0, 0, 1, 1], [], []>} : vector<16x4xf32>, vector<4x32xf32>, vector<16x32xf32> -> vector<16x32xf32>
    %20 = vector.broadcast %1 : vector<1x32xf32> to vector<16x32xf32>
    %21 = arith.addf %19, %20 : vector<16x32xf32>
    %cst_22 = arith.constant dense<0.000000e+00> : vector<1x32xf32>
    %22 = tpu.matmul %12, %6, %cst_22 {dimension_numbers = #tpu.dot_dimension_numbers<[1], [0], [0], [1], [0, 0, 1, 1], [], []>} : vector<1x32xf32>, vector<32x32xf32>, vector<1x32xf32> -> vector<1x32xf32>
    %23 = arith.addf %22, %13 : vector<1x32xf32>
    %cst_23 = arith.constant dense<0.000000e+00> : vector<16x32xf32>
    %24 = tpu.matmul %21, %7, %cst_23 {dimension_numbers = #tpu.dot_dimension_numbers<[1], [0], [0], [1], [0, 0, 1, 1], [], []>} : vector<16x32xf32>, vector<32x32xf32>, vector<16x32xf32> -> vector<16x32xf32>
    %25 = vector.broadcast %14 : vector<1x32xf32> to vector<16x32xf32>
    %26 = arith.addf %24, %25 : vector<16x32xf32>
    %cst_24 = arith.constant dense<0.000000e+00> : vector<16x32xf32>
    %27 = tpu.matmul %21, %8, %cst_24 {dimension_numbers = #tpu.dot_dimension_numbers<[1], [0], [0], [1], [0, 0, 1, 1], [], []>} : vector<16x32xf32>, vector<32x32xf32>, vector<16x32xf32> -> vector<16x32xf32>
    %28 = vector.broadcast %15 : vector<1x32xf32> to vector<16x32xf32>
    %29 = arith.addf %27, %28 : vector<16x32xf32>
    %30 = vector.broadcast %23 : vector<1x32xf32> to vector<16x32xf32>
    %31 = arith.mulf %26, %30 : vector<16x32xf32>
    %cst_25 = arith.constant dense<0.000000e+00> : vector<16x4xf32>
    %32 = tpu.matmul %31, %2, %cst_25 {dimension_numbers = #tpu.dot_dimension_numbers<[1], [0], [0], [1], [0, 0, 1, 1], [], []>} : vector<16x32xf32>, vector<32x4xf32>, vector<16x4xf32> -> vector<16x4xf32>
    %cst_26 = arith.constant 0.176776692 : f32
    %33 = vector.broadcast %cst_26 : f32 to vector<16x4xf32>
    %34 = arith.mulf %32, %33 : vector<16x4xf32>
    %35 = vector.shape_cast %34 : vector<16x4xf32> to vector<2x8x4xf32>
    %cst_27 = arith.constant dense<0xFF800000> : vector<2x4xf32>
    %36 = vector.multi_reduction <maximumf>, %35, %cst_27 [1] : vector<2x8x4xf32> to vector<2x4xf32>
    %37 = vector.shape_cast %36 : vector<2x4xf32> to vector<2x1x4xf32>
    %38 = vector.broadcast %37 : vector<2x1x4xf32> to vector<2x8x4xf32>
    %39 = arith.subf %35, %38 : vector<2x8x4xf32>
    %40 = math.exp %39 : vector<2x8x4xf32>
    %cst_28 = arith.constant dense<0.000000e+00> : vector<2x4xf32>
    %41 = vector.multi_reduction <add>, %40, %cst_28 [1] : vector<2x8x4xf32> to vector<2x4xf32>
    %42 = vector.shape_cast %41 : vector<2x4xf32> to vector<2x1x4xf32>
    %43 = vector.broadcast %42 : vector<2x1x4xf32> to vector<2x8x4xf32>
    %44 = arith.divf %40, %43 : vector<2x8x4xf32>
    %45 = vector.shape_cast %44 : vector<2x8x4xf32> to vector<16x4xf32>
    %cst_29 = arith.constant dense<0.000000e+00> : vector<16x32xf32>
    %46 = tpu.matmul %45, %3, %cst_29 {dimension_numbers = #tpu.dot_dimension_numbers<[1], [0], [0], [1], [0, 0, 1, 1], [], []>} : vector<16x4xf32>, vector<4x32xf32>, vector<16x32xf32> -> vector<16x32xf32>
    %47 = arith.mulf %46, %29 : vector<16x32xf32>
    %48 = vector.shape_cast %47 : vector<16x32xf32> to vector<2x8x32xf32>
    %cst_30 = arith.constant dense<0.000000e+00> : vector<2x32xf32>
    %49 = vector.multi_reduction <add>, %48, %cst_30 [1] : vector<2x8x32xf32> to vector<2x32xf32>
    %cst_31 = arith.constant dense<0.000000e+00> : vector<2x32xf32>
    %50 = tpu.matmul %49, %9, %cst_31 {dimension_numbers = #tpu.dot_dimension_numbers<[1], [0], [0], [1], [0, 0, 1, 1], [], []>} : vector<2x32xf32>, vector<32x32xf32>, vector<2x32xf32> -> vector<2x32xf32>
    %51 = vector.broadcast %16 : vector<1x32xf32> to vector<2x32xf32>
    %52 = arith.addf %50, %51 : vector<2x32xf32>
    %53 = vector.broadcast %12 : vector<1x32xf32> to vector<2x32xf32>
    %54 = arith.addf %53, %52 : vector<2x32xf32>
    %cst_32 = arith.constant dense<0.000000e+00> : vector<2x32xf32>
    %55 = tpu.matmul %54, %10, %cst_32 {dimension_numbers = #tpu.dot_dimension_numbers<[1], [0], [0], [1], [0, 0, 1, 1], [], []>} : vector<2x32xf32>, vector<32x32xf32>, vector<2x32xf32> -> vector<2x32xf32>
    %56 = vector.broadcast %17 : vector<1x32xf32> to vector<2x32xf32>
    %57 = arith.addf %55, %56 : vector<2x32xf32>
    %cst_33 = arith.constant 0.000000e+00 : f32
    %58 = vector.broadcast %cst_33 : f32 to vector<2x32xf32>
    %59 = arith.maximumf %57, %58 : vector<2x32xf32>
    %cst_34 = arith.constant dense<0.000000e+00> : vector<2x32xf32>
    %60 = tpu.matmul %59, %11, %cst_34 {dimension_numbers = #tpu.dot_dimension_numbers<[1], [0], [0], [1], [0, 0, 1, 1], [], []>} : vector<2x32xf32>, vector<32x32xf32>, vector<2x32xf32> -> vector<2x32xf32>
    %61 = arith.addf %54, %60 : vector<2x32xf32>
    %62 = vector.broadcast %18 : vector<1x32xf32> to vector<2x32xf32>
    %63 = arith.addf %61, %62 : vector<2x32xf32>
    %c200 = arith.constant 200 : index
    %c0_35 = arith.constant 0 : index
    %64 = vector.load %arg2[%c200, %c0_35] : memref<528x32xf32, #tpu.memory_space<vmem>>, vector<32x32xf32>
    %c232 = arith.constant 232 : index
    %c0_36 = arith.constant 0 : index
    %65 = vector.load %arg2[%c232, %c0_36] : memref<528x32xf32, #tpu.memory_space<vmem>>, vector<32x32xf32>
    %c264 = arith.constant 264 : index
    %c0_37 = arith.constant 0 : index
    %66 = vector.load %arg2[%c264, %c0_37] : memref<528x32xf32, #tpu.memory_space<vmem>>, vector<32x32xf32>
    %c296 = arith.constant 296 : index
    %c0_38 = arith.constant 0 : index
    %67 = vector.load %arg2[%c296, %c0_38] : memref<528x32xf32, #tpu.memory_space<vmem>>, vector<32x32xf32>
    %c328 = arith.constant 328 : index
    %c0_39 = arith.constant 0 : index
    %68 = vector.load %arg2[%c328, %c0_39] : memref<528x32xf32, #tpu.memory_space<vmem>>, vector<32x32xf32>
    %c360 = arith.constant 360 : index
    %c0_40 = arith.constant 0 : index
    %69 = vector.load %arg2[%c360, %c0_40] : memref<528x32xf32, #tpu.memory_space<vmem>>, vector<32x32xf32>
    %c8_41 = arith.constant 8 : index
    %c0_42 = arith.constant 0 : index
    %70 = vector.load %arg3[%c8_41, %c0_42] : memref<17x32xf32, #tpu.memory_space<vmem>>, vector<1x32xf32>
    %c9 = arith.constant 9 : index
    %c0_43 = arith.constant 0 : index
    %71 = vector.load %arg3[%c9, %c0_43] : memref<17x32xf32, #tpu.memory_space<vmem>>, vector<1x32xf32>
    %c10 = arith.constant 10 : index
    %c0_44 = arith.constant 0 : index
    %72 = vector.load %arg3[%c10, %c0_44] : memref<17x32xf32, #tpu.memory_space<vmem>>, vector<1x32xf32>
    %c11 = arith.constant 11 : index
    %c0_45 = arith.constant 0 : index
    %73 = vector.load %arg3[%c11, %c0_45] : memref<17x32xf32, #tpu.memory_space<vmem>>, vector<1x32xf32>
    %c12 = arith.constant 12 : index
    %c0_46 = arith.constant 0 : index
    %74 = vector.load %arg3[%c12, %c0_46] : memref<17x32xf32, #tpu.memory_space<vmem>>, vector<1x32xf32>
    %c13 = arith.constant 13 : index
    %c0_47 = arith.constant 0 : index
    %75 = vector.load %arg3[%c13, %c0_47] : memref<17x32xf32, #tpu.memory_space<vmem>>, vector<1x32xf32>
    %c14 = arith.constant 14 : index
    %c0_48 = arith.constant 0 : index
    %76 = vector.load %arg3[%c14, %c0_48] : memref<17x32xf32, #tpu.memory_space<vmem>>, vector<1x32xf32>
    %cst_49 = arith.constant dense<0.000000e+00> : vector<16x32xf32>
    %77 = tpu.matmul %5, %0, %cst_49 {dimension_numbers = #tpu.dot_dimension_numbers<[1], [0], [0], [1], [0, 0, 1, 1], [], []>} : vector<16x4xf32>, vector<4x32xf32>, vector<16x32xf32> -> vector<16x32xf32>
    %78 = vector.broadcast %1 : vector<1x32xf32> to vector<16x32xf32>
    %79 = arith.addf %77, %78 : vector<16x32xf32>
    %cst_50 = arith.constant dense<0.000000e+00> : vector<1x32xf32>
    %80 = tpu.matmul %70, %64, %cst_50 {dimension_numbers = #tpu.dot_dimension_numbers<[1], [0], [0], [1], [0, 0, 1, 1], [], []>} : vector<1x32xf32>, vector<32x32xf32>, vector<1x32xf32> -> vector<1x32xf32>
    %81 = arith.addf %80, %71 : vector<1x32xf32>
    %cst_51 = arith.constant dense<0.000000e+00> : vector<16x32xf32>
    %82 = tpu.matmul %79, %65, %cst_51 {dimension_numbers = #tpu.dot_dimension_numbers<[1], [0], [0], [1], [0, 0, 1, 1], [], []>} : vector<16x32xf32>, vector<32x32xf32>, vector<16x32xf32> -> vector<16x32xf32>
    %83 = vector.broadcast %72 : vector<1x32xf32> to vector<16x32xf32>
    %84 = arith.addf %82, %83 : vector<16x32xf32>
    %cst_52 = arith.constant dense<0.000000e+00> : vector<16x32xf32>
    %85 = tpu.matmul %79, %66, %cst_52 {dimension_numbers = #tpu.dot_dimension_numbers<[1], [0], [0], [1], [0, 0, 1, 1], [], []>} : vector<16x32xf32>, vector<32x32xf32>, vector<16x32xf32> -> vector<16x32xf32>
    %86 = vector.broadcast %73 : vector<1x32xf32> to vector<16x32xf32>
    %87 = arith.addf %85, %86 : vector<16x32xf32>
    %88 = vector.broadcast %81 : vector<1x32xf32> to vector<16x32xf32>
    %89 = arith.mulf %84, %88 : vector<16x32xf32>
    %cst_53 = arith.constant dense<0.000000e+00> : vector<16x4xf32>
    %90 = tpu.matmul %89, %2, %cst_53 {dimension_numbers = #tpu.dot_dimension_numbers<[1], [0], [0], [1], [0, 0, 1, 1], [], []>} : vector<16x32xf32>, vector<32x4xf32>, vector<16x4xf32> -> vector<16x4xf32>
    %cst_54 = arith.constant 0.176776692 : f32
    %91 = vector.broadcast %cst_54 : f32 to vector<16x4xf32>
    %92 = arith.mulf %90, %91 : vector<16x4xf32>
    %93 = vector.shape_cast %92 : vector<16x4xf32> to vector<2x8x4xf32>
    %cst_55 = arith.constant dense<0xFF800000> : vector<2x4xf32>
    %94 = vector.multi_reduction <maximumf>, %93, %cst_55 [1] : vector<2x8x4xf32> to vector<2x4xf32>
    %95 = vector.shape_cast %94 : vector<2x4xf32> to vector<2x1x4xf32>
    %96 = vector.broadcast %95 : vector<2x1x4xf32> to vector<2x8x4xf32>
    %97 = arith.subf %93, %96 : vector<2x8x4xf32>
    %98 = math.exp %97 : vector<2x8x4xf32>
    %cst_56 = arith.constant dense<0.000000e+00> : vector<2x4xf32>
    %99 = vector.multi_reduction <add>, %98, %cst_56 [1] : vector<2x8x4xf32> to vector<2x4xf32>
    %100 = vector.shape_cast %99 : vector<2x4xf32> to vector<2x1x4xf32>
    %101 = vector.broadcast %100 : vector<2x1x4xf32> to vector<2x8x4xf32>
    %102 = arith.divf %98, %101 : vector<2x8x4xf32>
    %103 = vector.shape_cast %102 : vector<2x8x4xf32> to vector<16x4xf32>
    %cst_57 = arith.constant dense<0.000000e+00> : vector<16x32xf32>
    %104 = tpu.matmul %103, %3, %cst_57 {dimension_numbers = #tpu.dot_dimension_numbers<[1], [0], [0], [1], [0, 0, 1, 1], [], []>} : vector<16x4xf32>, vector<4x32xf32>, vector<16x32xf32> -> vector<16x32xf32>
    %105 = arith.mulf %104, %87 : vector<16x32xf32>
    %106 = vector.shape_cast %105 : vector<16x32xf32> to vector<2x8x32xf32>
    %cst_58 = arith.constant dense<0.000000e+00> : vector<2x32xf32>
    %107 = vector.multi_reduction <add>, %106, %cst_58 [1] : vector<2x8x32xf32> to vector<2x32xf32>
    %cst_59 = arith.constant dense<0.000000e+00> : vector<2x32xf32>
    %108 = tpu.matmul %107, %67, %cst_59 {dimension_numbers = #tpu.dot_dimension_numbers<[1], [0], [0], [1], [0, 0, 1, 1], [], []>} : vector<2x32xf32>, vector<32x32xf32>, vector<2x32xf32> -> vector<2x32xf32>
    %109 = vector.broadcast %74 : vector<1x32xf32> to vector<2x32xf32>
    %110 = arith.addf %108, %109 : vector<2x32xf32>
    %111 = vector.broadcast %70 : vector<1x32xf32> to vector<2x32xf32>
    %112 = arith.addf %111, %110 : vector<2x32xf32>
    %cst_60 = arith.constant dense<0.000000e+00> : vector<2x32xf32>
    %113 = tpu.matmul %112, %68, %cst_60 {dimension_numbers = #tpu.dot_dimension_numbers<[1], [0], [0], [1], [0, 0, 1, 1], [], []>} : vector<2x32xf32>, vector<32x32xf32>, vector<2x32xf32> -> vector<2x32xf32>
    %114 = vector.broadcast %75 : vector<1x32xf32> to vector<2x32xf32>
    %115 = arith.addf %113, %114 : vector<2x32xf32>
    %cst_61 = arith.constant 0.000000e+00 : f32
    %116 = vector.broadcast %cst_61 : f32 to vector<2x32xf32>
    %117 = arith.maximumf %115, %116 : vector<2x32xf32>
    %cst_62 = arith.constant dense<0.000000e+00> : vector<2x32xf32>
    %118 = tpu.matmul %117, %69, %cst_62 {dimension_numbers = #tpu.dot_dimension_numbers<[1], [0], [0], [1], [0, 0, 1, 1], [], []>} : vector<2x32xf32>, vector<32x32xf32>, vector<2x32xf32> -> vector<2x32xf32>
    %119 = arith.addf %112, %118 : vector<2x32xf32>
    %120 = vector.broadcast %76 : vector<1x32xf32> to vector<2x32xf32>
    %121 = arith.addf %119, %120 : vector<2x32xf32>
    %c392 = arith.constant 392 : index
    %c0_63 = arith.constant 0 : index
    %122 = vector.load %arg2[%c392, %c0_63] : memref<528x32xf32, #tpu.memory_space<vmem>>, vector<32x32xf32>
    %c424 = arith.constant 424 : index
    %c0_64 = arith.constant 0 : index
    %123 = vector.load %arg2[%c424, %c0_64] : memref<528x32xf32, #tpu.memory_space<vmem>>, vector<32x32xf32>
    %c456 = arith.constant 456 : index
    %c0_65 = arith.constant 0 : index
    %124 = vector.load %arg2[%c456, %c0_65] : memref<528x32xf32, #tpu.memory_space<vmem>>, vector<32x32xf32>
    %c15 = arith.constant 15 : index
    %c0_66 = arith.constant 0 : index
    %125 = vector.load %arg3[%c15, %c0_66] : memref<17x32xf32, #tpu.memory_space<vmem>>, vector<1x32xf32>
    %c16 = arith.constant 16 : index
    %c0_67 = arith.constant 0 : index
    %126 = vector.load %arg3[%c16, %c0_67] : memref<17x32xf32, #tpu.memory_space<vmem>>, vector<1x1xf32>
    %cst_68 = arith.constant dense<0.000000e+00> : vector<2x32xf32>
    %127 = tpu.matmul %63, %122, %cst_68 {dimension_numbers = #tpu.dot_dimension_numbers<[1], [0], [0], [1], [0, 0, 1, 1], [], []>} : vector<2x32xf32>, vector<32x32xf32>, vector<2x32xf32> -> vector<2x32xf32>
    %cst_69 = arith.constant dense<0.000000e+00> : vector<2x32xf32>
    %128 = tpu.matmul %121, %123, %cst_69 {dimension_numbers = #tpu.dot_dimension_numbers<[1], [0], [0], [1], [0, 0, 1, 1], [], []>} : vector<2x32xf32>, vector<32x32xf32>, vector<2x32xf32> -> vector<2x32xf32>
    %129 = arith.addf %127, %128 : vector<2x32xf32>
    %130 = vector.broadcast %125 : vector<1x32xf32> to vector<2x32xf32>
    %131 = arith.addf %129, %130 : vector<2x32xf32>
    %cst_70 = arith.constant 0.000000e+00 : f32
    %132 = vector.broadcast %cst_70 : f32 to vector<2x32xf32>
    %133 = arith.maximumf %131, %132 : vector<2x32xf32>
    %cst_71 = arith.constant dense<0.000000e+00> : vector<2x32xf32>
    %134 = tpu.matmul %133, %124, %cst_71 {dimension_numbers = #tpu.dot_dimension_numbers<[1], [0], [0], [1], [0, 0, 1, 1], [], []>} : vector<2x32xf32>, vector<32x32xf32>, vector<2x32xf32> -> vector<2x32xf32>
    %135 = vector.extract_strided_slice %134 {offsets = [0, 0], sizes = [2, 1], strides = [1, 1]} : vector<2x32xf32> to vector<2x1xf32>
    %136 = vector.broadcast %126 : vector<1x1xf32> to vector<2x1xf32>
    %137 = arith.addf %135, %136 : vector<2x1xf32>
    %c0_72 = arith.constant 0 : index
    %c0_73 = arith.constant 0 : index
    %138 = vector.load %arg4[%c0_72, %c0_73] : memref<2x1xf32, #tpu.memory_space<vmem>>, vector<2x1xf32>
    tpu.vector_store %arg4[%c0_72, %c0_73], %137 {strides = array<i32>} : memref<2x1xf32, #tpu.memory_space<vmem>>, vector<2x1xf32>,
    return
  }
}

</mosaic_0001>

<llo_original>
// kernel: forward.1
$region0: #{forward.1}
  #allocation0 [shape = 'u32[]', space=smem, size = 0x4, offset = 0x4, fixed_abs, tag = 'smem constant byte address 0x4 - core index']
  #allocation1 [shape = 'u32[72,128]{1,0:T(1,128)}', space=vmem, size = 0x9000, scoped, tag = 'internal scratch']
  %s0 = inlined_call_operand.vmem [shape: f32[16,4], index: 0, kind: input, shape index: {}]
  %s1 = inlined_call_operand.vmem [shape: f32[16,4], index: 1, kind: input, shape index: {}]
  %s2 = inlined_call_operand.vmem [shape: f32[528,32], index: 2, kind: input, shape index: {}]
  %s3 = inlined_call_operand.vmem [shape: f32[17,32], index: 3, kind: input, shape index: {}]
  %s4 = inlined_call_operand.vmem [shape: f32[2,1], index: 4, kind: output, shape index: {}]
  %s5 = sld [smem:[#allocation0]]
  $region26: #{forward.1} parent=0
    _
  %s7 = ssub.s32 1, %s5
  %s8 = scalar_select 0, %s7, %s5
  // Predicated region
  $region2: #{forward.1} parent=0 // pred_check
    _
  $region3: #{forward.1} parent=0 // pred_check_branch
    %10 = sbr.rel (0) target = $region5
  $region4: #{forward.1} parent=0 // pred_region
    _
  $region5: #{forward.1} parent=0 // pred_fallthru
    _
  // Predicated region
  $region6: #{forward.1} parent=0 // pred_check
    _
  $region7: #{forward.1} parent=0 // pred_check_branch
    %12 = sbr.rel (0) target = $region9
  $region8: #{forward.1} parent=0 // pred_region
    _
  $region9: #{forward.1} parent=0 // pred_fallthru
    _
  // Predicated region
  $region10: #{forward.1} parent=0 // pred_check
    _
  $region11: #{forward.1} parent=0 // pred_check_branch
    %14 = sbr.rel (0) target = $region13
  $region12: #{forward.1} parent=0 // pred_region
    _
  $region13: #{forward.1} parent=0 // pred_fallthru
    _
  // Predicated region
  $region14: #{forward.1} parent=0 // pred_check
    _
  $region15: #{forward.1} parent=0 // pred_check_branch
    %16 = sbr.rel (0) target = $region17
  $region16: #{forward.1} parent=0 // pred_region
    _
  $region17: #{forward.1} parent=0 // pred_fallthru
    _
  %v17 = vld [vmem:[%s2] sm:$0xf]
  %v18 = vld [vmem:[%s3] sm:$0x1]
  %v19 = vld [vmem:[%s2 + $0x1e8] sm:$0xff]
  %v20 = vld [vmem:[%s2 + $0x1f0] sm:$0xff]
  %v21 = vld [vmem:[%s2 + $0x1f8] sm:$0xff]
  %v22 = vld [vmem:[%s2 + $0x200] sm:$0xff]
  %v23 = vld [vmem:[%s2 + $0x208] sm:$0xf]
  %v24 = vld [vmem:[%s0] sm:$0xff]
  %v25 = vld [vmem:[%s0 + $0x8] sm:$0xff]
  %v26 = vld [vmem:[%s1] sm:$0xff]
  %v27 = vld [vmem:[%s1 + $0x8] sm:$0xff]
  %v28 = vld [vmem:[%s2 + $0x8] sm:$0xff]
  %v29 = vld [vmem:[%s2 + $0x10] sm:$0xff]
  %v30 = vld [vmem:[%s2 + $0x18] sm:$0xff]
  %v31 = vld [vmem:[%s2 + $0x20] sm:$0xff]
  %v32 = vld [vmem:[%s2 + $0x28] sm:$0xff]
  %v33 = vld [vmem:[%s2 + $0x30] sm:$0xff]
  %v34 = vld [vmem:[%s2 + $0x38] sm:$0xff]
  %v35 = vld [vmem:[%s2 + $0x40] sm:$0xff]
  %v36 = vld [vmem:[%s2 + $0x48] sm:$0xff]
  %v37 = vld [vmem:[%s2 + $0x50] sm:$0xff]
  %v38 = vld [vmem:[%s2 + $0x58] sm:$0xff]
  %v39 = vld [vmem:[%s2 + $0x60] sm:$0xff]
  %v40 = vld [vmem:[%s2 + $0x68] sm:$0xff]
  %v41 = vld [vmem:[%s2 + $0x70] sm:$0xff]
  %v42 = vld [vmem:[%s2 + $0x78] sm:$0xff]
  %v43 = vld [vmem:[%s2 + $0x80] sm:$0xff]
  %v44 = vld [vmem:[%s2 + $0x88] sm:$0xff]
  %v45 = vld [vmem:[%s2 + $0x90] sm:$0xff]
  %v46 = vld [vmem:[%s2 + $0x98] sm:$0xff]
  %v47 = vld [vmem:[%s2 + $0xa0] sm:$0xff]
  %v48 = vld [vmem:[%s2 + $0xa8] sm:$0xff]
  %v49 = vld [vmem:[%s2 + $0xb0] sm:$0xff]
  %v50 = vld [vmem:[%s2 + $0xb8] sm:$0xff]
  %v51 = vld [vmem:[%s2 + $0xc0] sm:$0xff]
  %v52 = vld [vmem:[%s3 + $0x1] sm:$0x1]
  %v53 = vld [vmem:[%s3 + $0x2] sm:$0x1]
  %v54 = vld [vmem:[%s3 + $0x3] sm:$0x1]
  %v55 = vld [vmem:[%s3 + $0x4] sm:$0x1]
  %v56 = vld [vmem:[%s3 + $0x5] sm:$0x1]
  %v57 = vld [vmem:[%s3 + $0x6] sm:$0x1]
  %v58 = vld [vmem:[%s3 + $0x7] sm:$0x1]
  %v59 = vperm.slane %v18, 0
  %vm60 = vcmask 31744
  %v62 = vsel %vm60, %v24, 0
  %v65 = vsel %vm60, %v25, 0
  %vm67 = vcmask 1043456
  %v69 = vsel %vm67, %v17, 0
  %71 = vmatpush.msra.mxu0 0.0
  %72 = vmatpush.msra.mxu0 0.0
  %73 = vmatpush.msra.mxu0 0.0
  %74 = vmatpush.msra.mxu0 0.0
  %75 = vmatpush.msra.mxu0 0.0
  %76 = vmatpush.msra.mxu0 0.0
  %77 = vmatpush.msra.mxu0 0.0
  %78 = vmatpush.msra.mxu0 0.0
  %79 = vmatpush.msra.mxu0 0.0
  %80 = vmatpush.msra.mxu0 0.0
  %81 = vmatpush.msra.mxu0 0.0
  %82 = vmatpush.msra.mxu0 0.0
  %83 = vmatpush.msra.mxu0 0.0
  %84 = vmatpush.msra.mxu0 0.0
  %85 = vmatpush.msra.mxu0 0.0
  %86 = vmatpush.msra.mxu0 %v69
  %87 = vmatmul.f32.gmra.mxu0 %v62
  %v88 = vpop.f32.mrf.mxu0
  %v89 = vadd.f32 %v59, %v88
  %90 = vmatmul.f32.gmra.mxu0 %v65
  %v91 = vpop.f32.mrf.mxu0
  %v92 = vadd.f32 %v59, %v91
  %93 = vdwg.mxu0
  %vm94 = vcmask 261120
  %v96 = vsel %vm94, %v52, 0
  %98 = vmatpush.msra.mxu0 0.0
  %99 = vmatpush.msra.mxu0 0.0
  %100 = vmatpush.msra.mxu0 0.0
  %101 = vmatpush.msra.mxu0 0.0
  %102 = vmatpush.msra.mxu0 0.0
  %103 = vmatpush.msra.mxu0 0.0
  %104 = vmatpush.msra.mxu0 0.0
  %105 = vmatpush.msra.mxu0 0.0
  %106 = vmatpush.msra.mxu0 0.0
  %107 = vmatpush.msra.mxu0 0.0
  %108 = vmatpush.msra.mxu0 0.0
  %109 = vmatpush.msra.mxu0 0.0
  %110 = vmatpush.msra.mxu0 %v31
  %111 = vmatpush.msra.mxu0 %v30
  %112 = vmatpush.msra.mxu0 %v29
  %113 = vmatpush.msra.mxu0 %v28
  %114 = vmatmul.f32.gmra.mxu0 %v96
  %v115 = vpop.f32.mrf.mxu0
  %v116 = vadd.f32 %v53, %v115
  %117 = vdwg.mxu0
  %v118 = vperm.slane %v54, 0
  %v120 = vsel %vm94, %v89, 0
  %v123 = vsel %vm94, %v92, 0
  %125 = vmatpush.msra.mxu0 0.0
  %126 = vmatpush.msra.mxu0 0.0
  %127 = vmatpush.msra.mxu0 0.0
  %128 = vmatpush.msra.mxu0 0.0
  %129 = vmatpush.msra.mxu0 0.0
  %130 = vmatpush.msra.mxu0 0.0
  %131 = vmatpush.msra.mxu0 0.0
  %132 = vmatpush.msra.mxu0 0.0
  %133 = vmatpush.msra.mxu0 0.0
  %134 = vmatpush.msra.mxu0 0.0
  %135 = vmatpush.msra.mxu0 0.0
  %136 = vmatpush.msra.mxu0 0.0
  %137 = vmatpush.msra.mxu0 %v35
  %138 = vmatpush.msra.mxu0 %v34
  %139 = vmatpush.msra.mxu0 %v33
  %140 = vmatpush.msra.mxu0 %v32
  %141 = vmatmul.f32.gmra.mxu0 %v120
  %v142 = vpop.f32.mrf.mxu0
  %v143 = vadd.f32 %v118, %v142
  %144 = vmatmul.f32.gmra.mxu0 %v123
  %v145 = vpop.f32.mrf.mxu0
  %v146 = vadd.f32 %v118, %v145
  %147 = vdwg.mxu0
  %v148 = vperm.slane %v55, 0
  %149 = vmatpush.msra.mxu0 0.0
  %150 = vmatpush.msra.mxu0 0.0
  %151 = vmatpush.msra.mxu0 0.0
  %152 = vmatpush.msra.mxu0 0.0
  %153 = vmatpush.msra.mxu0 0.0
  %154 = vmatpush.msra.mxu0 0.0
  %155 = vmatpush.msra.mxu0 0.0
  %156 = vmatpush.msra.mxu0 0.0
  %157 = vmatpush.msra.mxu0 0.0
  %158 = vmatpush.msra.mxu0 0.0
  %159 = vmatpush.msra.mxu0 0.0
  %160 = vmatpush.msra.mxu0 0.0
  %161 = vmatpush.msra.mxu0 %v39
  %162 = vmatpush.msra.mxu0 %v38
  %163 = vmatpush.msra.mxu0 %v37
  %164 = vmatpush.msra.mxu0 %v36
  %165 = vmatmul.f32.gmra.mxu0 %v120
  %v166 = vpop.f32.mrf.mxu0
  %v167 = vadd.f32 %v148, %v166
  %168 = vmatmul.f32.gmra.mxu0 %v123
  %v169 = vpop.f32.mrf.mxu0
  %v170 = vadd.f32 %v148, %v169
  %171 = vdwg.mxu0
  %v172 = vperm.slane %v116, 0
  %v173 = vmul.f32 %v143, %v172
  %v174 = vmul.f32 %v146, %v172
  %v176 = vsel %vm94, %v173, 0
  %v179 = vsel %vm94, %v174, 0
  %181 = vmatpush.msra.mxu0 0.0
  %182 = vmatpush.msra.mxu0 0.0
  %183 = vmatpush.msra.mxu0 0.0
  %184 = vmatpush.msra.mxu0 0.0
  %185 = vmatpush.msra.mxu0 0.0
  %186 = vmatpush.msra.mxu0 0.0
  %187 = vmatpush.msra.mxu0 0.0
  %188 = vmatpush.msra.mxu0 0.0
  %189 = vmatpush.msra.mxu0 0.0
  %190 = vmatpush.msra.mxu0 0.0
  %191 = vmatpush.msra.mxu0 0.0
  %192 = vmatpush.msra.mxu0 0.0
  %193 = vmatpush.msra.mxu0 %v22
  %194 = vmatpush.msra.mxu0 %v21
  %195 = vmatpush.msra.mxu0 %v20
  %196 = vmatpush.msra.mxu0 %v19
  %197 = vmatmul.f32.gmra.mxu0 %v176
  %v198 = vpop.f32.mrf.mxu0
  %v199 = vadd.f32 0.0, %v198
  %200 = vmatmul.f32.gmra.mxu0 %v179
  %v201 = vpop.f32.mrf.mxu0
  %v202 = vadd.f32 0.0, %v201
  %203 = vdwg.mxu0
  %v204 = vmul.f32 %v199, 0.17677669
  %v205 = vmul.f32 %v202, 0.17677669
  %v206 = vsel %vm60, %v204, -inf
  %v207 = vrot.slane %v206, 4
  %v208 = vmax.f32 %v206, %v207
  %v209 = vrot.slane %v208, 2
  %v210 = vmax.f32 %v208, %v209
  %v211 = vrot.slane %v210, 1
  %v212 = vmax.f32 %v210, %v211
  %v213 = vsel %vm60, %v205, -inf
  %v214 = vrot.slane %v213, 4
  %v215 = vmax.f32 %v213, %v214
  %v216 = vrot.slane %v215, 2
  %v217 = vmax.f32 %v215, %v216
  %v218 = vrot.slane %v217, 1
  %v219 = vmax.f32 %v217, %v218
  %v220 = vsub.f32 %v204, %v212
  %v221 = vsub.f32 %v205, %v219
  %v222 = vmul.f32 %v220, 1.442695
  %v223 = vpow.pop %v222
  %v224 = vmul.f32 %v221, 1.442695
  %v225 = vpow.pop %v224
  %v226 = vsel %vm60, %v223, 0.0
  %v227 = vrot.slane %v226, 4
  %v228 = vadd.f32 %v226, %v227
  %v229 = vrot.slane %v228, 2
  %v230 = vadd.f32 %v228, %v229
  %v231 = vrot.slane %v230, 1
  %v232 = vadd.f32 %v230, %v231
  %v233 = vsel %vm60, %v225, 0.0
  %v234 = vrot.slane %v233, 4
  %v235 = vadd.f32 %v233, %v234
  %v236 = vrot.slane %v235, 2
  %v237 = vadd.f32 %v235, %v236
  %v238 = vrot.slane %v237, 1
  %v239 = vadd.f32 %v237, %v238
  %v240 = vrcp.pop %v232
  %v241 = vmul.f32 %v232, %v240
  %v242 = vsub.f32 1.0, %v241
  %v243 = vmul.f32 %v240, %v242
  %v244 = vadd.f32 %v240, %v243
  %vm245 = vweird.f32 %v232
  %vm246 = vweird.f32 %v240
  %vm247 = vmor %vm245, %vm246
  %v248 = vsel %vm247, %v240, %v244
  %v249 = vand.u32 2147483647, %v232
  %vm250 = vcmp.eq.f32.partialorder %v249, 8.507059e+37
  %v251 = vand.u32 %v232, 2147483648
  %v252 = vor.u32 1.1754944e-38, %v251
  %v253 = vsel %vm250, %v252, %v248
  %v254 = vmul.f32 %v223, %v253
  %v255 = vrcp.pop %v239
  %v256 = vmul.f32 %v239, %v255
  %v257 = vsub.f32 1.0, %v256
  %v258 = vmul.f32 %v255, %v257
  %v259 = vadd.f32 %v255, %v258
  %vm260 = vweird.f32 %v239
  %vm261 = vweird.f32 %v255
  %vm262 = vmor %vm260, %vm261
  %v263 = vsel %vm262, %v255, %v259
  %v264 = vand.u32 2147483647, %v239
  %vm265 = vcmp.eq.f32.partialorder %v264, 8.507059e+37
  %v266 = vand.u32 %v239, 2147483648
  %v267 = vor.u32 1.1754944e-38, %v266
  %v268 = vsel %vm265, %v267, %v263
  %v269 = vmul.f32 %v225, %v268
  %v271 = vsel %vm60, %v254, 0
  %v274 = vsel %vm60, %v269, 0
  %v277 = vsel %vm67, %v23, 0
  %279 = vmatpush.msra.mxu0 0.0
  %280 = vmatpush.msra.mxu0 0.0
  %281 = vmatpush.msra.mxu0 0.0
  %282 = vmatpush.msra.mxu0 0.0
  %283 = vmatpush.msra.mxu0 0.0
  %284 = vmatpush.msra.mxu0 0.0
  %285 = vmatpush.msra.mxu0 0.0
  %286 = vmatpush.msra.mxu0 0.0
  %287 = vmatpush.msra.mxu0 0.0
  %288 = vmatpush.msra.mxu0 0.0
  %289 = vmatpush.msra.mxu0 0.0
  %290 = vmatpush.msra.mxu0 0.0
  %291 = vmatpush.msra.mxu0 0.0
  %292 = vmatpush.msra.mxu0 0.0
  %293 = vmatpush.msra.mxu0 0.0
  %294 = vmatpush.msra.mxu0 %v277
  %295 = vmatmul.f32.gmra.mxu0 %v271
  %v296 = vpop.f32.mrf.mxu0
  %v297 = vadd.f32 0.0, %v296
  %298 = vmatmul.f32.gmra.mxu0 %v274
  %v299 = vpop.f32.mrf.mxu0
  %v300 = vadd.f32 0.0, %v299
  %301 = vdwg.mxu0
  %v302 = vmul.f32 %v297, %v167
  %v303 = vmul.f32 %v300, %v170
  %v304 = vsel %vm94, %v302, 0.0
  %v305 = vrot.slane %v304, 4
  %v306 = vadd.f32 %v304, %v305
  %v307 = vrot.slane %v306, 2
  %v308 = vadd.f32 %v306, %v307
  %v309 = vrot.slane %v308, 1
  %v310 = vadd.f32 %v308, %v309
  %v311 = vsel %vm94, %v303, 0.0
  %v312 = vrot.slane %v311, 4
  %v313 = vadd.f32 %v311, %v312
  %v314 = vrot.slane %v313, 2
  %v315 = vadd.f32 %v313, %v314
  %v316 = vrot.slane %v315, 1
  %v317 = vadd.f32 %v315, %v316
  %v318 = vperm.slane %v56, 0
  %vm321 = vcmask 1041409
  %v322 = vsel %vm321, %v317, %v310
  %v323 = vsel %vm94, %v322, 0
  %325 = vmatpush.msra.mxu0 0.0
  %326 = vmatpush.msra.mxu0 0.0
  %327 = vmatpush.msra.mxu0 0.0
  %328 = vmatpush.msra.mxu0 0.0
  %329 = vmatpush.msra.mxu0 0.0
  %330 = vmatpush.msra.mxu0 0.0
  %331 = vmatpush.msra.mxu0 0.0
  %332 = vmatpush.msra.mxu0 0.0
  %333 = vmatpush.msra.mxu0 0.0
  %334 = vmatpush.msra.mxu0 0.0
  %335 = vmatpush.msra.mxu0 0.0
  %336 = vmatpush.msra.mxu0 0.0
  %337 = vmatpush.msra.mxu0 %v43
  %338 = vmatpush.msra.mxu0 %v42
  %339 = vmatpush.msra.mxu0 %v41
  %340 = vmatpush.msra.mxu0 %v40
  %341 = vmatmul.f32.gmra.mxu0 %v323
  %v342 = vpop.f32.mrf.mxu0
  %v343 = vadd.f32 %v318, %v342
  %344 = vdwg.mxu0
  %v345 = vperm.slane %v52, 0
  %v346 = vadd.f32 %v345, %v343
  %v347 = vperm.slane %v57, 0
  %v349 = vsel %vm94, %v346, 0
  %351 = vmatpush.msra.mxu0 0.0
  %352 = vmatpush.msra.mxu0 0.0
  %353 = vmatpush.msra.mxu0 0.0
  %354 = vmatpush.msra.mxu0 0.0
  %355 = vmatpush.msra.mxu0 0.0
  %356 = vmatpush.msra.mxu0 0.0
  %357 = vmatpush.msra.mxu0 0.0
  %358 = vmatpush.msra.mxu0 0.0
  %359 = vmatpush.msra.mxu0 0.0
  %360 = vmatpush.msra.mxu0 0.0
  %361 = vmatpush.msra.mxu0 0.0
  %362 = vmatpush.msra.mxu0 0.0
  %363 = vmatpush.msra.mxu0 %v47
  %364 = vmatpush.msra.mxu0 %v46
  %365 = vmatpush.msra.mxu0 %v45
  %366 = vmatpush.msra.mxu0 %v44
  %367 = vmatmul.f32.gmra.mxu0 %v349
  %v368 = vpop.f32.mrf.mxu0
  %v369 = vadd.f32 %v347, %v368
  %370 = vdwg.mxu0
  %v371 = vmax.f32 %v369, 0.0
  %v373 = vsel %vm94, %v371, 0
  %375 = vmatpush.msra.mxu0 0.0
  %376 = vmatpush.msra.mxu0 0.0
  %377 = vmatpush.msra.mxu0 0.0
  %378 = vmatpush.msra.mxu0 0.0
  %379 = vmatpush.msra.mxu0 0.0
  %380 = vmatpush.msra.mxu0 0.0
  %381 = vmatpush.msra.mxu0 0.0
  %382 = vmatpush.msra.mxu0 0.0
  %383 = vmatpush.msra.mxu0 0.0
  %384 = vmatpush.msra.mxu0 0.0
  %385 = vmatpush.msra.mxu0 0.0
  %386 = vmatpush.msra.mxu0 0.0
  %387 = vmatpush.msra.mxu0 %v51
  %388 = vmatpush.msra.mxu0 %v50
  %389 = vmatpush.msra.mxu0 %v49
  %390 = vmatpush.msra.mxu0 %v48
  %391 = vmatmul.f32.gmra.mxu0 %v373
  %v392 = vpop.f32.mrf.mxu0
  %v393 = vadd.f32 0.0, %v392
  %394 = vdwg.mxu0
  %v395 = vadd.f32 %v346, %v393
  %v396 = vperm.slane %v58, 0
  %v397 = vadd.f32 %v395, %v396
  %v398 = vld [vmem:[%s2 + $0xc8] sm:$0xff]
  %v399 = vld [vmem:[%s2 + $0xd0] sm:$0xff]
  %v400 = vld [vmem:[%s2 + $0xd8] sm:$0xff]
  %v401 = vld [vmem:[%s2 + $0xe0] sm:$0xff]
  %v402 = vld [vmem:[%s2 + $0xe8] sm:$0xff]
  %v403 = vld [vmem:[%s2 + $0xf0] sm:$0xff]
  %v404 = vld [vmem:[%s2 + $0xf8] sm:$0xff]
  %v405 = vld [vmem:[%s2 + $0x100] sm:$0xff]
  %v406 = vld [vmem:[%s2 + $0x108] sm:$0xff]
  %v407 = vld [vmem:[%s2 + $0x110] sm:$0xff]
  %v408 = vld [vmem:[%s2 + $0x118] sm:$0xff]
  %v409 = vld [vmem:[%s2 + $0x120] sm:$0xff]
  %v410 = vld [vmem:[%s2 + $0x128] sm:$0xff]
  %v411 = vld [vmem:[%s2 + $0x130] sm:$0xff]
  %v412 = vld [vmem:[%s2 + $0x138] sm:$0xff]
  %v413 = vld [vmem:[%s2 + $0x140] sm:$0xff]
  %v414 = vld [vmem:[%s2 + $0x148] sm:$0xff]
  %v415 = vld [vmem:[%s2 + $0x150] sm:$0xff]
  %v416 = vld [vmem:[%s2 + $0x158] sm:$0xff]
  %v417 = vld [vmem:[%s2 + $0x160] sm:$0xff]
  %v418 = vld [vmem:[%s2 + $0x168] sm:$0xff]
  %v419 = vld [vmem:[%s2 + $0x170] sm:$0xff]
  %v420 = vld [vmem:[%s2 + $0x178] sm:$0xff]
  %v421 = vld [vmem:[%s2 + $0x180] sm:$0xff]
  %v422 = vld [vmem:[%s3 + $0x8] sm:$0x1]
  %v423 = vld [vmem:[%s3 + $0x9] sm:$0x1]
  %v424 = vld [vmem:[%s3 + $0xa] sm:$0x1]
  %v425 = vld [vmem:[%s3 + $0xb] sm:$0x1]
  %v426 = vld [vmem:[%s3 + $0xc] sm:$0x1]
  %v427 = vld [vmem:[%s3 + $0xd] sm:$0x1]
  %v428 = vld [vmem:[%s3 + $0xe] sm:$0x1]
  %v430 = vsel %vm60, %v26, 0
  %v433 = vsel %vm60, %v27, 0
  %435 = vmatpush.msra.mxu0 0.0
  %436 = vmatpush.msra.mxu0 0.0
  %437 = vmatpush.msra.mxu0 0.0
  %438 = vmatpush.msra.mxu0 0.0
  %439 = vmatpush.msra.mxu0 0.0
  %440 = vmatpush.msra.mxu0 0.0
  %441 = vmatpush.msra.mxu0 0.0
  %442 = vmatpush.msra.mxu0 0.0
  %443 = vmatpush.msra.mxu0 0.0
  %444 = vmatpush.msra.mxu0 0.0
  %445 = vmatpush.msra.mxu0 0.0
  %446 = vmatpush.msra.mxu0 0.0
  %447 = vmatpush.msra.mxu0 0.0
  %448 = vmatpush.msra.mxu0 0.0
  %449 = vmatpush.msra.mxu0 0.0
  %450 = vmatpush.msra.mxu0 %v69
  %451 = vmatmul.f32.gmra.mxu0 %v430
  %v452 = vpop.f32.mrf.mxu0
  %v453 = vadd.f32 %v59, %v452
  %454 = vmatmul.f32.gmra.mxu0 %v433
  %v455 = vpop.f32.mrf.mxu0
  %v456 = vadd.f32 %v59, %v455
  %457 = vdwg.mxu0
  %v459 = vsel %vm94, %v422, 0
  %461 = vmatpush.msra.mxu0 0.0
  %462 = vmatpush.msra.mxu0 0.0
  %463 = vmatpush.msra.mxu0 0.0
  %464 = vmatpush.msra.mxu0 0.0
  %465 = vmatpush.msra.mxu0 0.0
  %466 = vmatpush.msra.mxu0 0.0
  %467 = vmatpush.msra.mxu0 0.0
  %468 = vmatpush.msra.mxu0 0.0
  %469 = vmatpush.msra.mxu0 0.0
  %470 = vmatpush.msra.mxu0 0.0
  %471 = vmatpush.msra.mxu0 0.0
  %472 = vmatpush.msra.mxu0 0.0
  %473 = vmatpush.msra.mxu0 %v401
  %474 = vmatpush.msra.mxu0 %v400
  %475 = vmatpush.msra.mxu0 %v399
  %476 = vmatpush.msra.mxu0 %v398
  %477 = vmatmul.f32.gmra.mxu0 %v459
  %v478 = vpop.f32.mrf.mxu0
  %v479 = vadd.f32 %v423, %v478
  %480 = vdwg.mxu0
  %v481 = vperm.slane %v424, 0
  %v483 = vsel %vm94, %v453, 0
  %v486 = vsel %vm94, %v456, 0
  %488 = vmatpush.msra.mxu0 0.0
  %489 = vmatpush.msra.mxu0 0.0
  %490 = vmatpush.msra.mxu0 0.0
  %491 = vmatpush.msra.mxu0 0.0
  %492 = vmatpush.msra.mxu0 0.0
  %493 = vmatpush.msra.mxu0 0.0
  %494 = vmatpush.msra.mxu0 0.0
  %495 = vmatpush.msra.mxu0 0.0
  %496 = vmatpush.msra.mxu0 0.0
  %497 = vmatpush.msra.mxu0 0.0
  %498 = vmatpush.msra.mxu0 0.0
  %499 = vmatpush.msra.mxu0 0.0
  %500 = vmatpush.msra.mxu0 %v405
  %501 = vmatpush.msra.mxu0 %v404
  %502 = vmatpush.msra.mxu0 %v403
  %503 = vmatpush.msra.mxu0 %v402
  %504 = vmatmul.f32.gmra.mxu0 %v483
  %v505 = vpop.f32.mrf.mxu0
  %v506 = vadd.f32 %v481, %v505
  %507 = vmatmul.f32.gmra.mxu0 %v486
  %v508 = vpop.f32.mrf.mxu0
  %v509 = vadd.f32 %v481, %v508
  %510 = vdwg.mxu0
  %v511 = vperm.slane %v425, 0
  %512 = vmatpush.msra.mxu0 0.0
  %513 = vmatpush.msra.mxu0 0.0
  %514 = vmatpush.msra.mxu0 0.0
  %515 = vmatpush.msra.mxu0 0.0
  %516 = vmatpush.msra.mxu0 0.0
  %517 = vmatpush.msra.mxu0 0.0
  %518 = vmatpush.msra.mxu0 0.0
  %519 = vmatpush.msra.mxu0 0.0
  %520 = vmatpush.msra.mxu0 0.0
  %521 = vmatpush.msra.mxu0 0.0
  %522 = vmatpush.msra.mxu0 0.0
  %523 = vmatpush.msra.mxu0 0.0
  %524 = vmatpush.msra.mxu0 %v409
  %525 = vmatpush.msra.mxu0 %v408
  %526 = vmatpush.msra.mxu0 %v407
  %527 = vmatpush.msra.mxu0 %v406
  %528 = vmatmul.f32.gmra.mxu0 %v483
  %v529 = vpop.f32.mrf.mxu0
  %v530 = vadd.f32 %v511, %v529
  %531 = vmatmul.f32.gmra.mxu0 %v486
  %v532 = vpop.f32.mrf.mxu0
  %v533 = vadd.f32 %v511, %v532
  %534 = vdwg.mxu0
  %v535 = vperm.slane %v479, 0
  %v536 = vmul.f32 %v506, %v535
  %v537 = vmul.f32 %v509, %v535
  %v539 = vsel %vm94, %v536, 0
  %v542 = vsel %vm94, %v537, 0
  %544 = vmatpush.msra.mxu0 0.0
  %545 = vmatpush.msra.mxu0 0.0
  %546 = vmatpush.msra.mxu0 0.0
  %547 = vmatpush.msra.mxu0 0.0
  %548 = vmatpush.msra.mxu0 0.0
  %549 = vmatpush.msra.mxu0 0.0
  %550 = vmatpush.msra.mxu0 0.0
  %551 = vmatpush.msra.mxu0 0.0
  %552 = vmatpush.msra.mxu0 0.0
  %553 = vmatpush.msra.mxu0 0.0
  %554 = vmatpush.msra.mxu0 0.0
  %555 = vmatpush.msra.mxu0 0.0
  %556 = vmatpush.msra.mxu0 %v22
  %557 = vmatpush.msra.mxu0 %v21
  %558 = vmatpush.msra.mxu0 %v20
  %559 = vmatpush.msra.mxu0 %v19
  %560 = vmatmul.f32.gmra.mxu0 %v539
  %v561 = vpop.f32.mrf.mxu0
  %v562 = vadd.f32 0.0, %v561
  %563 = vmatmul.f32.gmra.mxu0 %v542
  %v564 = vpop.f32.mrf.mxu0
  %v565 = vadd.f32 0.0, %v564
  %566 = vdwg.mxu0
  %v567 = vmul.f32 %v562, 0.17677669
  %v568 = vmul.f32 %v565, 0.17677669
  %v569 = vsel %vm60, %v567, -inf
  %v570 = vrot.slane %v569, 4
  %v571 = vmax.f32 %v569, %v570
  %v572 = vrot.slane %v571, 2
  %v573 = vmax.f32 %v571, %v572
  %v574 = vrot.slane %v573, 1
  %v575 = vmax.f32 %v573, %v574
  %v576 = vsel %vm60, %v568, -inf
  %v577 = vrot.slane %v576, 4
  %v578 = vmax.f32 %v576, %v577
  %v579 = vrot.slane %v578, 2
  %v580 = vmax.f32 %v578, %v579
  %v581 = vrot.slane %v580, 1
  %v582 = vmax.f32 %v580, %v581
  %v583 = vsub.f32 %v567, %v575
  %v584 = vsub.f32 %v568, %v582
  %v585 = vmul.f32 %v583, 1.442695
  %v586 = vpow.pop %v585
  %v587 = vmul.f32 %v584, 1.442695
  %v588 = vpow.pop %v587
  %v589 = vsel %vm60, %v586, 0.0
  %v590 = vrot.slane %v589, 4
  %v591 = vadd.f32 %v589, %v590
  %v592 = vrot.slane %v591, 2
  %v593 = vadd.f32 %v591, %v592
  %v594 = vrot.slane %v593, 1
  %v595 = vadd.f32 %v593, %v594
  %v596 = vsel %vm60, %v588, 0.0
  %v597 = vrot.slane %v596, 4
  %v598 = vadd.f32 %v596, %v597
  %v599 = vrot.slane %v598, 2
  %v600 = vadd.f32 %v598, %v599
  %v601 = vrot.slane %v600, 1
  %v602 = vadd.f32 %v600, %v601
  %v603 = vrcp.pop %v595
  %v604 = vmul.f32 %v595, %v603
  %v605 = vsub.f32 1.0, %v604
  %v606 = vmul.f32 %v603, %v605
  %v607 = vadd.f32 %v603, %v606
  %vm608 = vweird.f32 %v595
  %vm609 = vweird.f32 %v603
  %vm610 = vmor %vm608, %vm609
  %v611 = vsel %vm610, %v603, %v607
  %v612 = vand.u32 2147483647, %v595
  %vm613 = vcmp.eq.f32.partialorder %v612, 8.507059e+37
  %v614 = vand.u32 %v595, 2147483648
  %v615 = vor.u32 1.1754944e-38, %v614
  %v616 = vsel %vm613, %v615, %v611
  %v617 = vmul.f32 %v586, %v616
  %v618 = vrcp.pop %v602
  %v619 = vmul.f32 %v602, %v618
  %v620 = vsub.f32 1.0, %v619
  %v621 = vmul.f32 %v618, %v620
  %v622 = vadd.f32 %v618, %v621
  %vm623 = vweird.f32 %v602
  %vm624 = vweird.f32 %v618
  %vm625 = vmor %vm623, %vm624
  %v626 = vsel %vm625, %v618, %v622
  %v627 = vand.u32 2147483647, %v602
  %vm628 = vcmp.eq.f32.partialorder %v627, 8.507059e+37
  %v629 = vand.u32 %v602, 2147483648
  %v630 = vor.u32 1.1754944e-38, %v629
  %v631 = vsel %vm628, %v630, %v626
  %v632 = vmul.f32 %v588, %v631
  %v634 = vsel %vm60, %v617, 0
  %v637 = vsel %vm60, %v632, 0
  %639 = vmatpush.msra.mxu0 0.0
  %640 = vmatpush.msra.mxu0 0.0
  %641 = vmatpush.msra.mxu0 0.0
  %642 = vmatpush.msra.mxu0 0.0
  %643 = vmatpush.msra.mxu0 0.0
  %644 = vmatpush.msra.mxu0 0.0
  %645 = vmatpush.msra.mxu0 0.0
  %646 = vmatpush.msra.mxu0 0.0
  %647 = vmatpush.msra.mxu0 0.0
  %648 = vmatpush.msra.mxu0 0.0
  %649 = vmatpush.msra.mxu0 0.0
  %650 = vmatpush.msra.mxu0 0.0
  %651 = vmatpush.msra.mxu0 0.0
  %652 = vmatpush.msra.mxu0 0.0
  %653 = vmatpush.msra.mxu0 0.0
  %654 = vmatpush.msra.mxu0 %v277
  %655 = vmatmul.f32.gmra.mxu0 %v634
  %v656 = vpop.f32.mrf.mxu0
  %v657 = vadd.f32 0.0, %v656
  %658 = vmatmul.f32.gmra.mxu0 %v637
  %v659 = vpop.f32.mrf.mxu0
  %v660 = vadd.f32 0.0, %v659
  %661 = vdwg.mxu0
  %v662 = vmul.f32 %v657, %v530
  %v663 = vmul.f32 %v660, %v533
  %v664 = vsel %vm94, %v662, 0.0
  %v665 = vrot.slane %v664, 4
  %v666 = vadd.f32 %v664, %v665
  %v667 = vrot.slane %v666, 2
  %v668 = vadd.f32 %v666, %v667
  %v669 = vrot.slane %v668, 1
  %v670 = vadd.f32 %v668, %v669
  %v671 = vsel %vm94, %v663, 0.0
  %v672 = vrot.slane %v671, 4
  %v673 = vadd.f32 %v671, %v672
  %v674 = vrot.slane %v673, 2
  %v675 = vadd.f32 %v673, %v674
  %v676 = vrot.slane %v675, 1
  %v677 = vadd.f32 %v675, %v676
  %v678 = vperm.slane %v426, 0
  %v681 = vsel %vm321, %v677, %v670
  %v682 = vsel %vm94, %v681, 0
  %684 = vmatpush.msra.mxu0 0.0
  %685 = vmatpush.msra.mxu0 0.0
  %686 = vmatpush.msra.mxu0 0.0
  %687 = vmatpush.msra.mxu0 0.0
  %688 = vmatpush.msra.mxu0 0.0
  %689 = vmatpush.msra.mxu0 0.0
  %690 = vmatpush.msra.mxu0 0.0
  %691 = vmatpush.msra.mxu0 0.0
  %692 = vmatpush.msra.mxu0 0.0
  %693 = vmatpush.msra.mxu0 0.0
  %694 = vmatpush.msra.mxu0 0.0
  %695 = vmatpush.msra.mxu0 0.0
  %696 = vmatpush.msra.mxu0 %v413
  %697 = vmatpush.msra.mxu0 %v412
  %698 = vmatpush.msra.mxu0 %v411
  %699 = vmatpush.msra.mxu0 %v410
  %700 = vmatmul.f32.gmra.mxu0 %v682
  %v701 = vpop.f32.mrf.mxu0
  %v702 = vadd.f32 %v678, %v701
  %703 = vdwg.mxu0
  %v704 = vperm.slane %v422, 0
  %v705 = vadd.f32 %v704, %v702
  %v706 = vperm.slane %v427, 0
  %v708 = vsel %vm94, %v705, 0
  %710 = vmatpush.msra.mxu0 0.0
  %711 = vmatpush.msra.mxu0 0.0
  %712 = vmatpush.msra.mxu0 0.0
  %713 = vmatpush.msra.mxu0 0.0
  %714 = vmatpush.msra.mxu0 0.0
  %715 = vmatpush.msra.mxu0 0.0
  %716 = vmatpush.msra.mxu0 0.0
  %717 = vmatpush.msra.mxu0 0.0
  %718 = vmatpush.msra.mxu0 0.0
  %719 = vmatpush.msra.mxu0 0.0
  %720 = vmatpush.msra.mxu0 0.0
  %721 = vmatpush.msra.mxu0 0.0
  %722 = vmatpush.msra.mxu0 %v417
  %723 = vmatpush.msra.mxu0 %v416
  %724 = vmatpush.msra.mxu0 %v415
  %725 = vmatpush.msra.mxu0 %v414
  %726 = vmatmul.f32.gmra.mxu0 %v708
  %v727 = vpop.f32.mrf.mxu0
  %v728 = vadd.f32 %v706, %v727
  %729 = vdwg.mxu0
  %v730 = vmax.f32 %v728, 0.0
  %v732 = vsel %vm94, %v730, 0
  %734 = vmatpush.msra.mxu0 0.0
  %735 = vmatpush.msra.mxu0 0.0
  %736 = vmatpush.msra.mxu0 0.0
  %737 = vmatpush.msra.mxu0 0.0
  %738 = vmatpush.msra.mxu0 0.0
  %739 = vmatpush.msra.mxu0 0.0
  %740 = vmatpush.msra.mxu0 0.0
  %741 = vmatpush.msra.mxu0 0.0
  %742 = vmatpush.msra.mxu0 0.0
  %743 = vmatpush.msra.mxu0 0.0
  %744 = vmatpush.msra.mxu0 0.0
  %745 = vmatpush.msra.mxu0 0.0
  %746 = vmatpush.msra.mxu0 %v421
  %747 = vmatpush.msra.mxu0 %v420
  %748 = vmatpush.msra.mxu0 %v419
  %749 = vmatpush.msra.mxu0 %v418
  %750 = vmatmul.f32.gmra.mxu0 %v732
  %v751 = vpop.f32.mrf.mxu0
  %v752 = vadd.f32 0.0, %v751
  %753 = vdwg.mxu0
  %v754 = vadd.f32 %v705, %v752
  %v755 = vperm.slane %v428, 0
  %v756 = vadd.f32 %v754, %v755
  %v757 = vld [vmem:[%s2 + $0x188] sm:$0xff]
  %v758 = vld [vmem:[%s2 + $0x190] sm:$0xff]
  %v759 = vld [vmem:[%s2 + $0x198] sm:$0xff]
  %v760 = vld [vmem:[%s2 + $0x1a0] sm:$0xff]
  %v761 = vld [vmem:[%s2 + $0x1a8] sm:$0xff]
  %v762 = vld [vmem:[%s2 + $0x1b0] sm:$0xff]
  %v763 = vld [vmem:[%s2 + $0x1b8] sm:$0xff]
  %v764 = vld [vmem:[%s2 + $0x1c0] sm:$0xff]
  %v765 = vld [vmem:[%s2 + $0x1c8] sm:$0xff]
  %v766 = vld [vmem:[%s2 + $0x1d0] sm:$0xff]
  %v767 = vld [vmem:[%s2 + $0x1d8] sm:$0xff]
  %v768 = vld [vmem:[%s2 + $0x1e0] sm:$0xff]
  %v769 = vld [vmem:[%s3 + $0xf] sm:$0x1]
  %v770 = vld [vmem:[%s3 + $0x10] sm:$0x1]
  %v772 = vsel %vm94, %v756, 0
  %774 = vmatpush.msra.mxu0 0.0
  %775 = vmatpush.msra.mxu0 0.0
  %776 = vmatpush.msra.mxu0 0.0
  %777 = vmatpush.msra.mxu0 0.0
  %778 = vmatpush.msra.mxu0 0.0
  %779 = vmatpush.msra.mxu0 0.0
  %780 = vmatpush.msra.mxu0 0.0
  %781 = vmatpush.msra.mxu0 0.0
  %782 = vmatpush.msra.mxu0 0.0
  %783 = vmatpush.msra.mxu0 0.0
  %784 = vmatpush.msra.mxu0 0.0
  %785 = vmatpush.msra.mxu0 0.0
  %786 = vmatpush.msra.mxu0 %v764
  %787 = vmatpush.msra.mxu0 %v763
  %788 = vmatpush.msra.mxu0 %v762
  %789 = vmatpush.msra.mxu0 %v761
  %790 = vmatmul.f32.gmra.mxu0 %v772
  %v791 = vpop.f32.mrf.mxu0
  %v792 = vadd.f32 0.0, %v791
  %793 = vdwg.mxu0
  %v795 = vsel %vm94, %v397, 0
  %797 = vmatpush.msra.mxu0 0.0
  %798 = vmatpush.msra.mxu0 0.0
  %799 = vmatpush.msra.mxu0 0.0
  %800 = vmatpush.msra.mxu0 0.0
  %801 = vmatpush.msra.mxu0 0.0
  %802 = vmatpush.msra.mxu0 0.0
  %803 = vmatpush.msra.mxu0 0.0
  %804 = vmatpush.msra.mxu0 0.0
  %805 = vmatpush.msra.mxu0 0.0
  %806 = vmatpush.msra.mxu0 0.0
  %807 = vmatpush.msra.mxu0 0.0
  %808 = vmatpush.msra.mxu0 0.0
  %809 = vmatpush.msra.mxu0 %v760
  %810 = vmatpush.msra.mxu0 %v759
  %811 = vmatpush.msra.mxu0 %v758
  %812 = vmatpush.msra.mxu0 %v757
  %813 = vmatmul.f32.gmra.mxu0 %v795
  %v814 = vpop.f32.mrf.mxu0
  %v815 = vadd.f32 %v792, %v814
  %816 = vdwg.mxu0
  %v817 = vperm.slane %v769, 0
  %v818 = vadd.f32 %v815, %v817
  %v819 = vmax.f32 %v818, 0.0
  %v821 = vsel %vm94, %v819, 0
  %823 = vmatpush.msra.mxu0 0.0
  %824 = vmatpush.msra.mxu0 0.0
  %825 = vmatpush.msra.mxu0 0.0
  %826 = vmatpush.msra.mxu0 0.0
  %827 = vmatpush.msra.mxu0 0.0
  %828 = vmatpush.msra.mxu0 0.0
  %829 = vmatpush.msra.mxu0 0.0
  %830 = vmatpush.msra.mxu0 0.0
  %831 = vmatpush.msra.mxu0 0.0
  %832 = vmatpush.msra.mxu0 0.0
  %833 = vmatpush.msra.mxu0 0.0
  %834 = vmatpush.msra.mxu0 0.0
  %835 = vmatpush.msra.mxu0 %v768
  %836 = vmatpush.msra.mxu0 %v767
  %837 = vmatpush.msra.mxu0 %v766
  %838 = vmatpush.msra.mxu0 %v765
  %839 = vmatmul.f32.gmra.mxu0 %v821
  %v840 = vpop.f32.mrf.mxu0
  %v841 = vadd.f32 0.0, %v840
  %842 = vdwg.mxu0
  %v843 = vperm.slane %v770, 0
  %v844 = vadd.f32 %v841, %v843
  %vm845 = vcmask 1024
  %846 = vst.msk [vmem:[%s4] sm:$0x3] %vm845, %v844
  // Predicated region
  $region18: #{forward.1} parent=0 // pred_check
    _
  $region19: #{forward.1} parent=0 // pred_check_branch
    %848 = sbr.rel (0) target = $region21
  $region20: #{forward.1} parent=0 // pred_region
    _
  $region21: #{forward.1} parent=0 // pred_fallthru
    _
  // Predicated region
  $region22: #{forward.1} parent=0 // pred_check
    _
  $region23: #{forward.1} parent=0 // pred_check_branch
    %850 = sbr.rel (0) target = $region25
  $region24: #{forward.1} parent=0 // pred_region
    _
  $region25: #{forward.1} parent=0 // pred_fallthru
    _

</llo_original>
